<compile_context>
chip_gen: v6e
topology: v6e:2x2x1
jax: 0.10.0
libtpu: 0.0.40
codegen_flags: <defaults>
</compile_context>

<pallas_src>
import functools

import jax
import jax.numpy as jnp
from jax.experimental import pallas as pl
from jax.experimental.pallas import tpu as pltpu


def _energy_kernel(key_ref, qproj_ref, wk_t_ref, wo_row_ref, out_ref, *,
                   compute_dtype):
    # key_ref   : (1, Tt, Kd)  key dtype (streamed; one batch row, Tt frames)
    # qproj_ref : (1, A, 1)    f32      (query @ Wq column for this batch row)
    # wk_t_ref  : (A, Kd)      compute dtype (grid-resident)
    # wo_row_ref: (1, A)       compute dtype (grid-resident)
    # out_ref   : (1, 1, Tt)   out dtype (lane-dense, already [N,1,T] order)
    key_tile = key_ref[0]                                    # (Tt, Kd)
    # 32-bit XLU transpose of the streamed tile, then in-kernel cast to the
    # compute dtype (no wrapper HBM pass for either).
    key_t = jnp.transpose(key_tile).astype(compute_dtype)    # (Kd, Tt)

    # MXU #1: (A, Kd) @ (Kd, Tt) -> (A, Tt), f32 accumulation, T on lanes.
    kproj_t = jnp.dot(wk_t_ref[...], key_t,
                      preferred_element_type=jnp.float32)    # (A, Tt) f32

    # Broadcast the per-row query projection column over the Tt lanes.
    temp = kproj_t + qproj_ref[0]                            # (A, Tt) f32
    act = jnp.tanh(temp.astype(compute_dtype))               # EUP (bf16 on v6e/v7x)

    # MXU #2: (1, A) @ (A, Tt) -> (1, Tt); lane-dense, unmasked stores.
    e = jnp.dot(wo_row_ref[...], act,
                preferred_element_type=jnp.float32)          # (1, Tt) f32
    out_ref[0] = e.astype(out_ref.dtype)


def _pick_t_block(tp, kd, a, key_itemsize, comp_itemsize, out_itemsize,
                  budget_bytes, cap=2048):
    """Largest T tile (multiple of 128, dividing tp, <= cap) under the budget.

    per_lane counts everything that scales with the T tile: the double-buffered
    streamed key tile and output row, plus the in-kernel f32/compute-dtype
    intermediates (key^T copy, kproj^T, temp, tanh activation) that the
    previous version under-counted.
    """
    per_lane = (2 * kd * key_itemsize            # double-buffered key tile
                + 2 * out_itemsize               # double-buffered output row
                + kd * 4 + kd * comp_itemsize    # key^T (f32) + compute-dtype copy
                + a * 4                          # kproj^T (f32 MXU accumulator)
                + a * 4                          # temp = kproj^T + qproj (f32)
                + a * comp_itemsize)             # tanh activation
    tt = int(budget_bytes // per_lane) // 128 * 128
    tt = max(128, min(tt, cap, tp))
    while tp % tt:          # keep an exact tiling; tp is a multiple of 128,
        tt -= 128           # so this always terminates at a valid tile.
    return tt, per_lane


@functools.partial(jax.jit,
                   static_argnames=("compute_dtype", "out_dtype",
                                    "t_budget_bytes"))
def bahdanau_attention_energy(key, query, w_key, w_query, w_out, *,
                              compute_dtype=jnp.bfloat16,
                              out_dtype=jnp.float32,
                              t_budget_bytes=8 * 1024 * 1024):
    """key: [N, T, Kd], query: [N, 1, Qd]; weights pre-transposed [in, out].

    compute_dtype: bf16 default (v6e/v7x); use jnp.float32 on v5e.
    t_budget_bytes: per-step VMEM budget (incl. intermediates); conservative
    default fits v7x's 64 MiB VMEM, can be raised on v6e's 128 MiB.
    """
    N, T, Kd = key.shape
    Nq, Tq, Qd = query.shape
    A = w_key.shape[1]
    assert Nq == N and Tq == 1
    assert w_key.shape == (Kd, A)
    assert w_query.shape == (Qd, A)
    assert w_out.shape == (A, 1)

    # Hoisted query projection: one tiny (N,Qd)@(Qd,A) XLA matmul, kept f32,
    # stored as a per-row column (N, A, 1) so it broadcasts over the T lanes.
    qproj = jnp.dot(query.reshape(N, Qd).astype(jnp.float32),
                    w_query.astype(jnp.float32),
                    preferred_element_type=jnp.float32).reshape(N, A, 1)

    # Tiny weights, pre-transposed for the T-on-lanes formulation.
    wk_t = jnp.transpose(w_key).astype(compute_dtype)        # (A, Kd)
    wo_row = w_out.reshape(1, A).astype(compute_dtype)       # (1, A)

    # Pad T up to a lane multiple only when needed (see TODO above).
    Tp = ((T + 127) // 128) * 128
    key_p = key if Tp == T else jnp.pad(key, ((0, 0), (0, Tp - T), (0, 0)))

    Tt, per_lane = _pick_t_block(Tp, Kd, A,
                                 jnp.dtype(key.dtype).itemsize,
                                 jnp.dtype(compute_dtype).itemsize,
                                 jnp.dtype(out_dtype).itemsize,
                                 t_budget_bytes)
    grid = (N, Tp // Tt)

    # Scoped-VMEM limit derived from the actual per-step footprint
    # (+ resident weights / qproj block / headroom), clamped to sane bounds.
    vmem_limit = int(max(32 << 20, min(100 << 20,
                                       2 * per_lane * Tt + (4 << 20))))

    out = pl.pallas_call(
        functools.partial(_energy_kernel, compute_dtype=compute_dtype),
        out_shape=jax.ShapeDtypeStruct((N, 1, Tp), out_dtype),
        grid_spec=pltpu.PrefetchScalarGridSpec(
            num_scalar_prefetch=0,
            grid=grid,
            in_specs=[
                pl.BlockSpec((1, Tt, Kd), lambda n, j: (n, j, 0)),   # key (streamed)
                pl.BlockSpec((1, A, 1), lambda n, j: (n, 0, 0)),     # qproj column
                pl.BlockSpec((A, Kd), lambda n, j: (0, 0)),          # Wk^T (resident)
                pl.BlockSpec((1, A), lambda n, j: (0, 0)),           # wo^T (resident)
            ],
            out_specs=pl.BlockSpec((1, 1, Tt), lambda n, j: (n, 0, j)),
        ),
        compiler_params=pltpu.CompilerParams(
            dimension_semantics=("parallel", "parallel"),
            vmem_limit_bytes=vmem_limit,
        ),
    )(key_p, qproj, wk_t, wo_row)

    # Crop any T padding; result is already in [N, 1, T] order.
    return out[:, :, :T]


def _reference(key, query, w_key, w_query, w_out):
    k = jnp.einsum("ntk,ka->nta", key, w_key)
    q = jnp.einsum("nsq,qa->nsa", query, w_query)
    e = jnp.einsum("nta,ao->nto", jnp.tanh(k + q), w_out)    # [N, T, 1]
    return jnp.transpose(e, (0, 2, 1))                       # [N, 1, T]


if __name__ == "__main__":
    # Small, deterministic setup (matches module __init__ shapes).
    N, T = 2, 8
    key_dim, query_dim, att_dim = 32, 48, 64

    rng = jax.random.PRNGKey(0)
    r1, r2, r3, r4, r5 = jax.random.split(rng, 5)

    key = jax.random.normal(r1, (N, T, key_dim), dtype=jnp.float32)
    query = jax.random.normal(r2, (N, 1, query_dim), dtype=jnp.float32)

    # nn.Linear(in, out, bias=False) weight is [out, in]; store transposed [in, out].
    w_key = jax.random.uniform(
        r3, (key_dim, att_dim), jnp.float32,
        -1.0 / key_dim ** 0.5, 1.0 / key_dim ** 0.5)
    w_query = jax.random.uniform(
        r4, (query_dim, att_dim), jnp.float32,
        -1.0 / query_dim ** 0.5, 1.0 / query_dim ** 0.5)
    w_out = jax.random.uniform(
        r5, (att_dim, 1), jnp.float32,
        -1.0 / att_dim ** 0.5, 1.0 / att_dim ** 0.5)

    energy = bahdanau_attention_energy(key, query, w_key, w_query, w_out)
    energy = jax.block_until_ready(energy)

    ref = _reference(key, query, w_key, w_query, w_out)
    assert energy.shape == (N, 1, T)
    # bf16 MXU matmuls (f32 accumulation) + bf16 tanh => relaxed tolerance.
    assert jnp.allclose(energy, ref, atol=5e-2, rtol=5e-2), \
        float(jnp.max(jnp.abs(energy - ref)))

    print("KERNEL_OK")
</pallas_src>

<mosaic_0001>
module attributes {stable_mosaic.version = 11 : i64} {
  func.func @_energy_kernel(%arg0: i32, %arg1: i32, %arg2: memref<1x128x32xf32, #tpu.memory_space<vmem>>, %arg3: memref<1x64x1xf32, #tpu.memory_space<vmem>>, %arg4: memref<64x32xbf16, #tpu.memory_space<vmem>>, %arg5: memref<1x64xbf16, #tpu.memory_space<vmem>>, %arg6: memref<1x1x128xf32, #tpu.memory_space<vmem>>) attributes {dimension_semantics = [#tpu.dimension_semantics<parallel>, #tpu.dimension_semantics<parallel>], iteration_bounds = array<i64: 2, 1>, scalar_prefetch = 0 : i64, scratch_operands = 0 : i64, tpu.core_type = #tpu.core_type<tc>, window_params = [{transform_indices = @transform_0, window_bounds = array<i64: 1, 128, 32>}, {transform_indices = @transform_1, window_bounds = array<i64: 1, 64, 1>}, {pipeline_mode = #tpu.pipeline_mode<synchronous>, transform_indices = @transform_2, window_bounds = array<i64: 64, 32>}, {pipeline_mode = #tpu.pipeline_mode<synchronous>, transform_indices = @transform_3, window_bounds = array<i64: 1, 64>}, {transform_indices = @transform_4, window_bounds = array<i64: 1, 1, 128>}]} {
    %c0 = arith.constant 0 : index
    %c0_0 = arith.constant 0 : index
    %c0_1 = arith.constant 0 : index
    %0 = vector.load %arg2[%c0, %c0_0, %c0_1] : memref<1x128x32xf32, #tpu.memory_space<vmem>>, vector<1x128x32xf32>
    %1 = vector.shape_cast %0 : vector<1x128x32xf32> to vector<128x32xf32>
    %2 = tpu.transpose %1, [1, 0] : vector<128x32xf32> -> vector<32x128xf32>
    %3 = arith.truncf %2 : vector<32x128xf32> to vector<32x128xbf16>
    %c0_2 = arith.constant 0 : index
    %c0_3 = arith.constant 0 : index
    %4 = vector.load %arg4[%c0_2, %c0_3] : memref<64x32xbf16, #tpu.memory_space<vmem>>, vector<64x32xbf16>
    %cst = arith.constant dense<0.000000e+00> : vector<64x128xf32>
    %5 = tpu.matmul %4, %3, %cst {dimension_numbers = #tpu.dot_dimension_numbers<[1], [0], [0], [1], [0, 0, 1, 1], [], []>} : vector<64x32xbf16>, vector<32x128xbf16>, vector<64x128xf32> -> vector<64x128xf32>
    %c0_4 = arith.constant 0 : index
    %c0_5 = arith.constant 0 : index
    %c0_6 = arith.constant 0 : index
    %6 = vector.load %arg3[%c0_4, %c0_5, %c0_6] : memref<1x64x1xf32, #tpu.memory_space<vmem>>, vector<1x64x1xf32>
    %7 = vector.shape_cast %6 : vector<1x64x1xf32> to vector<64x1xf32>
    %8 = vector.broadcast %7 : vector<64x1xf32> to vector<64x128xf32>
    %9 = arith.addf %5, %8 : vector<64x128xf32>
    %10 = arith.truncf %9 : vector<64x128xf32> to vector<64x128xbf16>
    %11 = math.tanh %10 : vector<64x128xbf16>
    %c0_7 = arith.constant 0 : index
    %c0_8 = arith.constant 0 : index
    %12 = vector.load %arg5[%c0_7, %c0_8] : memref<1x64xbf16, #tpu.memory_space<vmem>>, vector<1x64xbf16>
    %cst_9 = arith.constant dense<0.000000e+00> : vector<1x128xf32>
    %13 = tpu.matmul %12, %11, %cst_9 {dimension_numbers = #tpu.dot_dimension_numbers<[1], [0], [0], [1], [0, 0, 1, 1], [], []>} : vector<1x64xbf16>, vector<64x128xbf16>, vector<1x128xf32> -> vector<1x128xf32>
    %c0_10 = arith.constant 0 : index
    %c0_11 = arith.constant 0 : index
    %c0_12 = arith.constant 0 : index
    %14 = vector.load %arg6[%c0_10, %c0_11, %c0_12] : memref<1x1x128xf32, #tpu.memory_space<vmem>>, vector<1x1x128xf32>
    %15 = vector.shape_cast %14 : vector<1x1x128xf32> to vector<1x128xf32>
    %16 = vector.shape_cast %13 : vector<1x128xf32> to vector<1x1x128xf32>
    tpu.vector_store %arg6[%c0_10, %c0_11, %c0_12], %16 {strides = array<i32>} : memref<1x1x128xf32, #tpu.memory_space<vmem>>, vector<1x1x128xf32>,
    return
  }
  func.func @transform_0(%arg0: i32, %arg1: i32) -> (i32, i32, i32) {
    %c0_i32 = arith.constant 0 : i32
    %c0_i32_0 = arith.constant 0 : i32
    return %arg0, %arg1, %c0_i32 : i32, i32, i32
  }
  func.func @transform_1(%arg0: i32, %arg1: i32) -> (i32, i32, i32) {
    %c0_i32 = arith.constant 0 : i32
    %c0_i32_0 = arith.constant 0 : i32
    %c0_i32_1 = arith.constant 0 : i32
    return %arg0, %c0_i32, %c0_i32_0 : i32, i32, i32
  }
  func.func @transform_2(%arg0: i32, %arg1: i32) -> (i32, i32) {
    %c0_i32 = arith.constant 0 : i32
    %c0_i32_0 = arith.constant 0 : i32
    %c0_i32_1 = arith.constant 0 : i32
    return %c0_i32, %c0_i32_0 : i32, i32
  }
  func.func @transform_3(%arg0: i32, %arg1: i32) -> (i32, i32) {
    %c0_i32 = arith.constant 0 : i32
    %c0_i32_0 = arith.constant 0 : i32
    %c0_i32_1 = arith.constant 0 : i32
    return %c0_i32, %c0_i32_0 : i32, i32
  }
  func.func @transform_4(%arg0: i32, %arg1: i32) -> (i32, i32, i32) {
    %c0_i32 = arith.constant 0 : i32
    %c0_i32_0 = arith.constant 0 : i32
    return %arg0, %c0_i32, %arg1 : i32, i32, i32
  }
}

</mosaic_0001>

<llo_original>
// kernel: bahdanau_attention_energy.1
$region0: #{bahdanau_attention_energy.1}
  #allocation0 [shape = 'u32[]', space=smem, size = 0x4, offset = 0x4, fixed_abs, tag = 'smem constant byte address 0x4 - core index']
  #allocation1 [shape = 'u32[144,128]{1,0:T(1,128)}', space=vmem, size = 0x12000, scoped, tag = 'internal scratch']
  %s0 = inlined_call_operand.vmem [shape: f32[2,128,32], index: 0, kind: input, shape index: {}]
  %s1 = inlined_call_operand.vmem [shape: f32[2,64,1], index: 1, kind: input, shape index: {}]
  %s2 = inlined_call_operand.vmem [shape: bf16[64,32], index: 2, kind: input, shape index: {}]
  %s3 = inlined_call_operand.vmem [shape: bf16[1,64], index: 3, kind: input, shape index: {}]
  %s4 = inlined_call_operand.hbm [shape: f32[2,1,128], index: 4, kind: output, shape index: {}]
  %s5 = sld [smem:[#allocation0]]
  $region49: #{bahdanau_attention_energy.1} parent=0
    _
  %s7 = ssub.s32 1, %s5
  %s8 = scalar_select 0, %s7, %s5
  $region1: #{bahdanau_attention_energy.1} parent=0
    #allocation2 [shape = 'u8[1024]{0}', space=vmem, size = 0x400, scoped, tag = 'output window, operand 0']
    #allocation3 [shape = 's32[2]{0}', space=sflag, size = 0x8, scoped, tag = 'scoped memory for bahdanau_attention_energy.1']
    %9 = vsyncpa [#allocation3], 0
    %s10 = scalar_lea.sflag [#allocation3], 1
    %11 = vsyncpa %s10, 0
    loop: start=0, step=1, limit=4
    $region2: #{bahdanau_attention_energy.1} parent=1 // loop_pre_header
      _
    $region3: #{bahdanau_attention_energy.1} parent=1 // loop_header
      %s13 = sphi 0, %s17
      %p14 = scmp.ge.s32.totalorder %s13, 4
      %s20 = sphi 0, %s32
      %s21 = sphi 0, %s28
      %s22 = sphi 0, %s20
      %s23 = sphi 0, %s21
      %s24 = sphi 0, %s22
      %s25 = sphi 0, %s23
      %s37 = sphi 0, %s39
      %s40 = sphi 0, %s37
      %s41 = sphi 0, %s40
      %s57 = sphi 0, %s41
      %s63 = sphi 0, %s65
      %s66 = sphi 0, %s63
      %s67 = sphi 0, %s66
      %s83 = sphi 0, %s67
      %s87 = sphi 0, %s87
      %s89 = sphi 0, %s87
      %s90 = sphi 0, %s89
      %s104 = sphi 0, %s90
      %s108 = sphi 0, %s108
      %s110 = sphi 0, %s108
      %s111 = sphi 0, %s110
      %s125 = sphi 0, %s111
      %s133 = sphi 0, %s135
      %s136 = sphi 0, %s133
      %s137 = sphi 0, %s136
      %s153 = sphi 0, %s137
    $region4: #{bahdanau_attention_energy.1} parent=1 // loop_header_branch
      %16 = sbr.rel (%p14) target = $region8
    $region5: #{bahdanau_attention_energy.1} parent=1 // loop_body
      %s18 = ssub.s32 %s13, 1
      %s19 = ssub.s32 %s13, 2
      %s26 = sadd.s32 1, %s21
      %p27 = scmp.ge.s32.totalorder %s26, 1
      %s28 = scalar_select %p27, 0, %s26
      %s29 = sadd.s32 1, %s20
      %s30 = scalar_select %p27, %s29, %s20
      %p31 = scmp.ge.s32.totalorder %s30, 2
      %s32 = scalar_select %p31, 0, %s30
      %s33 = ssub.s32 %s20, %s32
      %s34 = ssub.s32 %s21, %s28
      %s35 = sor.u32 %s33, %s34
      %p36 = scmp.eq.s32.totalorder %s35, 0
      %s38 = sadd.s32 %s37, 1
      %s39 = scalar_select %p36, %s37, %s38
      %p42 = pneg %p36
      %p43 = scmp.eq.s32.totalorder %s13, 1
      %p44 = por %p42, %p43
      %p45 = scmp.ne.s32.totalorder %s37, %s40
      %p46 = scmp.eq.s32.totalorder %s13, 0
      %p47 = por %p45, %p46
      %p48 = scmp.ne.s32.totalorder %s37, %s40
      %p49 = scmp.eq.s32.totalorder %s18, 1
      %p50 = por %p48, %p49
      %p51 = scmp.ne.s32.totalorder %s40, %s41
      %p52 = scmp.eq.s32.totalorder %s18, 0
      %p53 = por %p51, %p52
      %p54 = scmp.ne.s32.totalorder %s40, %s41
      %p55 = scmp.eq.s32.totalorder %s19, 1
      %p56 = por %p54, %p55
      %p58 = scmp.ne.s32.totalorder %s41, %s57
      %p59 = scmp.eq.s32.totalorder %s19, 0
      %p60 = por %p58, %p59
      %s61 = ssub.s32 %s20, %s32
      %p62 = scmp.eq.s32.totalorder %s61, 0
      %s64 = sadd.s32 %s63, 1
      %s65 = scalar_select %p62, %s63, %s64
      %p68 = pneg %p62
      %p69 = scmp.eq.s32.totalorder %s13, 1
      %p70 = por %p68, %p69
      %p71 = scmp.ne.s32.totalorder %s63, %s66
      %p72 = scmp.eq.s32.totalorder %s13, 0
      %p73 = por %p71, %p72
      %p74 = scmp.ne.s32.totalorder %s63, %s66
      %p75 = scmp.eq.s32.totalorder %s18, 1
      %p76 = por %p74, %p75
      %p77 = scmp.ne.s32.totalorder %s66, %s67
      %p78 = scmp.eq.s32.totalorder %s18, 0
      %p79 = por %p77, %p78
      %p80 = scmp.ne.s32.totalorder %s66, %s67
      %p81 = scmp.eq.s32.totalorder %s19, 1
      %p82 = por %p80, %p81
      %p84 = scmp.ne.s32.totalorder %s67, %s83
      %p85 = scmp.eq.s32.totalorder %s19, 0
      %p86 = por %p84, %p85
      %s88 = sadd.s32 %s87, 1
      %p91 = scmp.eq.s32.totalorder %s13, 1
      %p92 = scmp.ne.s32.totalorder %s87, %s89
      %p93 = scmp.eq.s32.totalorder %s13, 0
      %p94 = por %p92, %p93
      %p95 = scmp.ne.s32.totalorder %s87, %s89
      %p96 = scmp.eq.s32.totalorder %s18, 1
      %p97 = por %p95, %p96
      %p98 = scmp.ne.s32.totalorder %s89, %s90
      %p99 = scmp.eq.s32.totalorder %s18, 0
      %p100 = por %p98, %p99
      %p101 = scmp.ne.s32.totalorder %s89, %s90
      %p102 = scmp.eq.s32.totalorder %s19, 1
      %p103 = por %p101, %p102
      %p105 = scmp.ne.s32.totalorder %s90, %s104
      %p106 = scmp.eq.s32.totalorder %s19, 0
      %p107 = por %p105, %p106
      %s109 = sadd.s32 %s108, 1
      %p112 = scmp.eq.s32.totalorder %s13, 1
      %p113 = scmp.ne.s32.totalorder %s108, %s110
      %p114 = scmp.eq.s32.totalorder %s13, 0
      %p115 = por %p113, %p114
      %p116 = scmp.ne.s32.totalorder %s108, %s110
      %p117 = scmp.eq.s32.totalorder %s18, 1
      %p118 = por %p116, %p117
      %p119 = scmp.ne.s32.totalorder %s110, %s111
      %p120 = scmp.eq.s32.totalorder %s18, 0
      %p121 = por %p119, %p120
      %p122 = scmp.ne.s32.totalorder %s110, %s111
      %p123 = scmp.eq.s32.totalorder %s19, 1
      %p124 = por %p122, %p123
      %p126 = scmp.ne.s32.totalorder %s111, %s125
      %p127 = scmp.eq.s32.totalorder %s19, 0
      %p128 = por %p126, %p127
      %s129 = ssub.s32 %s20, %s32
      %s130 = ssub.s32 %s21, %s28
      %s131 = sor.u32 %s129, %s130
      %p132 = scmp.eq.s32.totalorder %s131, 0
      %s134 = sadd.s32 %s133, 1
      %s135 = scalar_select %p132, %s133, %s134
      %p138 = pneg %p132
      %p139 = scmp.eq.s32.totalorder %s13, 1
      %p140 = por %p138, %p139
      %p141 = scmp.ne.s32.totalorder %s133, %s136
      %p142 = scmp.eq.s32.totalorder %s13, 0
      %p143 = por %p141, %p142
      %p144 = scmp.ne.s32.totalorder %s133, %s136
      %p145 = scmp.eq.s32.totalorder %s18, 1
      %p146 = por %p144, %p145
      %p147 = scmp.ne.s32.totalorder %s136, %s137
      %p148 = scmp.eq.s32.totalorder %s18, 0
      %p149 = por %p147, %p148
      %p150 = scmp.ne.s32.totalorder %s136, %s137
      %p151 = scmp.eq.s32.totalorder %s19, 1
      %p152 = por %p150, %p151
      %p154 = scmp.ne.s32.totalorder %s137, %s153
      %p155 = scmp.eq.s32.totalorder %s19, 0
      %p156 = por %p154, %p155
      %p157 = scmp.le.s32.totalorder 1, %s13
      %p158 = scmp.lt.s32.totalorder %s13, 3
      %p159 = pnand %p157, %p158
      %p160 = pneg %p159
      // Predicated region
      $region9: #{bahdanau_attention_energy.1} parent=5 // pred_check
        _
      $region10: #{bahdanau_attention_energy.1} parent=5 // pred_check_branch
        %162 = sbr.rel (%p159) target = $region12
      $region11: #{bahdanau_attention_energy.1} parent=5 // pred_region
        %s163 = ssub.s32 %s13, 1
        // Predicated region
        $region13: #{bahdanau_attention_energy.1} parent=11 // pred_check
          %p164 = pneg %p100
        $region14: #{bahdanau_attention_energy.1} parent=11 // pred_check_branch
          %166 = sbr.rel (%p164) target = $region16
        $region15: #{bahdanau_attention_energy.1} parent=11 // pred_region
          _
        $region16: #{bahdanau_attention_energy.1} parent=11 // pred_fallthru
          _
        // Predicated region
        $region17: #{bahdanau_attention_energy.1} parent=11 // pred_check
          %p167 = pneg %p121
        $region18: #{bahdanau_attention_energy.1} parent=11 // pred_check_branch
          %169 = sbr.rel (%p167) target = $region20
        $region19: #{bahdanau_attention_energy.1} parent=11 // pred_region
          _
        $region20: #{bahdanau_attention_energy.1} parent=11 // pred_fallthru
          _
      $region12: #{bahdanau_attention_energy.1} parent=5 // pred_fallthru
        _
      %p170 = scmp.lt.s32.totalorder %s13, 2
      // Predicated region
      $region21: #{bahdanau_attention_energy.1} parent=5 // pred_check
        %p171 = pneg %p170
      $region22: #{bahdanau_attention_energy.1} parent=5 // pred_check_branch
        %173 = sbr.rel (%p171) target = $region24
      $region23: #{bahdanau_attention_energy.1} parent=5 // pred_region
        // Predicated region
        $region25: #{bahdanau_attention_energy.1} parent=23 // pred_check
          %p174 = pneg %p47
        $region26: #{bahdanau_attention_energy.1} parent=23 // pred_check_branch
          %176 = sbr.rel (%p174) target = $region28
        $region27: #{bahdanau_attention_energy.1} parent=23 // pred_region
          %s177 = smul.u32 16, %s21
          %p178 = scmp.lt.s32.totalorder %s20, 1
          %s179 = scalar_select %p178, %s20, 1
          %p180 = scmp.lt.s32.totalorder %s177, 15
          %s181 = scalar_select %p180, %s177, 15
          %s182 = smul.addr %s179, 16
          %s183 = sadd.s32 %s181, %s182
          %s184 = smul.addr %s183, 8
          %s185 = scalar_lea.vmem %s0, %s184
          %s186 = smul.u32 16, %s21
        $region28: #{bahdanau_attention_energy.1} parent=23 // pred_fallthru
          _
        // Predicated region
        $region29: #{bahdanau_attention_energy.1} parent=23 // pred_check
          %p187 = pneg %p73
        $region30: #{bahdanau_attention_energy.1} parent=23 // pred_check_branch
          %189 = sbr.rel (%p187) target = $region32
        $region31: #{bahdanau_attention_energy.1} parent=23 // pred_region
          %p190 = scmp.lt.s32.totalorder %s20, 1
          %s191 = scalar_select %p190, %s20, 1
          %s192 = smul.addr %s191, 8
          %s193 = smul.addr %s192, 8
          %s194 = scalar_lea.vmem %s1, %s193
        $region32: #{bahdanau_attention_energy.1} parent=23 // pred_fallthru
          _
      $region24: #{bahdanau_attention_energy.1} parent=5 // pred_fallthru
        _
      %p195 = scmp.le.s32.totalorder 1, %s13
      %p196 = scmp.lt.s32.totalorder %s13, 3
      %p197 = pnand %p195, %p196
      %p198 = pneg %p197
      // Predicated region
      $region33: #{bahdanau_attention_energy.1} parent=5 // pred_check
        _
      $region34: #{bahdanau_attention_energy.1} parent=5 // pred_check_branch
        %200 = sbr.rel (%p197) target = $region36
      $region35: #{bahdanau_attention_energy.1} parent=5 // pred_region
        %s201 = ssub.s32 %s13, 1
        %s202 = smul.u32 16, %s23
        %p203 = scmp.lt.s32.totalorder %s22, 1
        %s204 = scalar_select %p203, %s22, 1
        %p205 = scmp.lt.s32.totalorder %s202, 15
        %s206 = scalar_select %p205, %s202, 15
        %s207 = smul.addr %s204, 16
        %s208 = sadd.s32 %s206, %s207
        %s209 = smul.addr %s208, 8
        %s210 = scalar_lea.vmem %s0, %s209
        %p211 = pneg %p53
        %p212 = pneg %p50
        %p213 = scmp.lt.s32.totalorder %s22, 1
        %s214 = scalar_select %p213, %s22, 1
        %s215 = smul.addr %s214, 8
        %s216 = smul.addr %s215, 8
        %s217 = scalar_lea.vmem %s1, %s216
        %p218 = pneg %p79
        %p219 = pneg %p76
        %p220 = pneg %p100
        %p221 = pneg %p97
        %p222 = pneg %p121
        %p223 = pneg %p118
        %p224 = pneg %p149
        %p225 = pneg %p146
        %s226 = sand.u32 %s136, 1
        %s227 = scalar_lea.sflag [#allocation3], %s226
        %s228 = sand.u32 %s136, 1
        %s229 = scalar_lea.vmem [#allocation2], %s228
        %s230 = smul.u32 16, %s23
        %p231 = scmp.lt.s32.totalorder %s22, 1
        %s232 = scalar_select %p231, %s22, 1
        %p233 = scmp.lt.s32.totalorder %s230, 15
        %s234 = scalar_select %p233, %s230, 15
        %s235 = smul.addr %s232, 16
        %s236 = sadd.s32 %s234, %s235
        %s237 = smul.addr %s236, 8
        %s238 = scalar_lea.vmem %s0, %s237
        %s239 = smul.u32 16, %s23
        %p240 = scmp.lt.s32.totalorder %s22, 1
        %s241 = scalar_select %p240, %s22, 1
        %s242 = smul.addr %s241, 8
        %s243 = smul.addr %s242, 8
        %s244 = scalar_lea.vmem %s1, %s243
        %v246 = vld [vmem:[%s238] sm:$0xff]
        %v247 = vld [vmem:[%s238 + $0x8] sm:$0xff]
        %v248 = vld [vmem:[%s238 + $0x10] sm:$0xff]
        %v249 = vld [vmem:[%s238 + $0x18] sm:$0xff]
        %v250 = vld [vmem:[%s238 + $0x20] sm:$0xff]
        %v251 = vld [vmem:[%s238 + $0x28] sm:$0xff]
        %v252 = vld [vmem:[%s238 + $0x30] sm:$0xff]
        %v253 = vld [vmem:[%s238 + $0x38] sm:$0xff]
        %v254 = vld [vmem:[%s238 + $0x40] sm:$0xff]
        %v255 = vld [vmem:[%s238 + $0x48] sm:$0xff]
        %v256 = vld [vmem:[%s238 + $0x50] sm:$0xff]
        %v257 = vld [vmem:[%s238 + $0x58] sm:$0xff]
        %v258 = vld [vmem:[%s238 + $0x60] sm:$0xff]
        %v259 = vld [vmem:[%s238 + $0x68] sm:$0xff]
        %v260 = vld [vmem:[%s238 + $0x70] sm:$0xff]
        %v261 = vld [vmem:[%s238 + $0x78] sm:$0xff]
        %262 = vxpose.xlu0.b32.start [1/16] %v246, 128
        %263 = vxpose.xlu0.b32.cont [2/16] %v247, 128
        %264 = vxpose.xlu0.b32.cont [3/16] %v248, 128
        %265 = vxpose.xlu0.b32.cont [4/16] %v249, 128
        %266 = vxpose.xlu0.b32.cont [5/16] %v250, 128
        %267 = vxpose.xlu0.b32.cont [6/16] %v251, 128
        %268 = vxpose.xlu0.b32.cont [7/16] %v252, 128
        %269 = vxpose.xlu0.b32.cont [8/16] %v253, 128
        %270 = vxpose.xlu0.b32.cont [9/16] %v254, 128
        %271 = vxpose.xlu0.b32.cont [10/16] %v255, 128
        %272 = vxpose.xlu0.b32.cont [11/16] %v256, 128
        %273 = vxpose.xlu0.b32.cont [12/16] %v257, 128
        %274 = vxpose.xlu0.b32.cont [13/16] %v258, 128
        %275 = vxpose.xlu0.b32.cont [14/16] %v259, 128
        %276 = vxpose.xlu0.b32.cont [15/16] %v260, 128
        %277 = vxpose.xlu0.b32.end [16/16] %v261, 128
        %v278 = vpop.trf.xlu0
        %v279 = vpop.trf.xlu0
        %v280 = vpop.trf.xlu0
        %v281 = vpop.trf.xlu0
        %v282 = vpop.trf.xlu0
        %v283 = vpop.trf.xlu0
        %v284 = vpop.trf.xlu0
        %v285 = vpop.trf.xlu0
        %v286 = vpop.trf.xlu0
        %v287 = vpop.trf.xlu0
        %v288 = vpop.trf.xlu0
        %v289 = vpop.trf.xlu0
        %v290 = vpop.trf.xlu0
        %v291 = vpop.trf.xlu0
        %v292 = vpop.trf.xlu0
        %v293 = vpop.trf.xlu0
        %v294 = vpack.c.bf16 %v279, %v278
        %v295 = vpack.c.bf16 %v281, %v280
        %v296 = vld [vmem:[%s2] sm:$0xf]
        %v297 = vld [vmem:[%s2 + $0x4] sm:$0xf]
        %v298 = vld [vmem:[%s2 + $0x8] sm:$0xf]
        %v299 = vld [vmem:[%s2 + $0xc] sm:$0xf]
        %v300 = vld [vmem:[%s2 + $0x10] sm:$0xf]
        %v301 = vld [vmem:[%s2 + $0x14] sm:$0xf]
        %v302 = vld [vmem:[%s2 + $0x18] sm:$0xf]
        %v303 = vld [vmem:[%s2 + $0x1c] sm:$0xf]
        %v304 = vld [vmem:[%s244] sm:$0xff]
        %v305 = vld [vmem:[%s244 + $0x8] sm:$0xff]
        %v306 = vld [vmem:[%s244 + $0x10] sm:$0xff]
        %v307 = vld [vmem:[%s244 + $0x18] sm:$0xff]
        %v308 = vld [vmem:[%s244 + $0x20] sm:$0xff]
        %v309 = vld [vmem:[%s244 + $0x28] sm:$0xff]
        %v310 = vld [vmem:[%s244 + $0x30] sm:$0xff]
        %v311 = vld [vmem:[%s244 + $0x38] sm:$0xff]
        %313 = vset.pattern.permute.xlu0 0
        %314 = vperm.xlu0 %313, %v304
        %v315 = vpop.permute.xlu0 %314
        %318 = vset.pattern.permute.xlu0 0
        %319 = vperm.xlu0 %318, %v305
        %v320 = vpop.permute.xlu0 %319
        %323 = vset.pattern.permute.xlu0 0
        %324 = vperm.xlu0 %323, %v306
        %v325 = vpop.permute.xlu0 %324
        %328 = vset.pattern.permute.xlu0 0
        %329 = vperm.xlu0 %328, %v307
        %v330 = vpop.permute.xlu0 %329
        %333 = vset.pattern.permute.xlu0 0
        %334 = vperm.xlu0 %333, %v308
        %v335 = vpop.permute.xlu0 %334
        %338 = vset.pattern.permute.xlu0 0
        %339 = vperm.xlu0 %338, %v309
        %v340 = vpop.permute.xlu0 %339
        %343 = vset.pattern.permute.xlu0 0
        %344 = vperm.xlu0 %343, %v310
        %v345 = vpop.permute.xlu0 %344
        %348 = vset.pattern.permute.xlu0 0
        %349 = vperm.xlu0 %348, %v311
        %v350 = vpop.permute.xlu0 %349
        %v360 = vunpack.c.l.b16 %v296
        %v361 = vunpack.c.l.b16 %v297
        %v362 = vunpack.c.l.b16 %v298
        %v363 = vunpack.c.l.b16 %v299
        %v364 = vunpack.c.l.b16 %v300
        %v365 = vunpack.c.l.b16 %v301
        %v366 = vunpack.c.l.b16 %v302
        %v367 = vunpack.c.l.b16 %v303
        %v368 = vpack.c.b16 %v361, %v360
        %v369 = vpack.c.b16 %v363, %v362
        %v370 = vpack.c.b16 %v365, %v364
        %v371 = vpack.c.b16 %v367, %v366
        %vm372 = vcmask 261120
        %v374 = vsel %vm372, %v368, 0
        %v377 = vsel %vm372, %v369, 0
        %v380 = vsel %vm372, %v370, 0
        %v383 = vsel %vm372, %v371, 0
        %385 = vmatprep.subr.bf16.mxu0 0
        %386 = vmatpush1.bf16.msra.mxu0 0
        %387 = vmatprep.subr.bf16.mxu0 0
        %388 = vmatpush1.bf16.msra.mxu0 0
        %389 = vmatprep.subr.bf16.mxu0 0
        %390 = vmatpush1.bf16.msra.mxu0 0
        %391 = vmatprep.subr.bf16.mxu0 0
        %392 = vmatpush1.bf16.msra.mxu0 0
        %393 = vmatprep.subr.bf16.mxu0 0
        %394 = vmatpush1.bf16.msra.mxu0 0
        %395 = vmatprep.subr.bf16.mxu0 0
        %396 = vmatpush1.bf16.msra.mxu0 0
        %397 = vmatprep.subr.bf16.mxu0 0
        %398 = vmatpush1.bf16.msra.mxu0 %v295
        %399 = vmatprep.subr.bf16.mxu0 0
        %400 = vmatpush1.bf16.msra.mxu0 %v294
        %401 = vmatprep.subr.bf16.mxu0 0
        %402 = vmatpush2.bf16.msra.mxu0 0
        %403 = vmatprep.subr.bf16.mxu0 0
        %404 = vmatpush2.bf16.msra.mxu0 0
        %405 = vmatprep.subr.bf16.mxu0 0
        %406 = vmatpush2.bf16.msra.mxu0 0
        %407 = vmatprep.subr.bf16.mxu0 0
        %408 = vmatpush2.bf16.msra.mxu0 0
        %409 = vmatprep.subr.bf16.mxu0 0
        %410 = vmatpush2.bf16.msra.mxu0 0
        %411 = vmatprep.subr.bf16.mxu0 0
        %412 = vmatpush2.bf16.msra.mxu0 0
        %413 = vmatprep.subr.bf16.mxu0 0
        %414 = vmatpush2.bf16.msra.mxu0 0
        %415 = vmatprep.subr.bf16.mxu0 0
        %416 = vmatpush2.bf16.msra.mxu0 0
        %417 = vmatprep.mubr.bf16.mxu0 0
        %418 = vmatmul.mubr.bf16.gmra.mxu0 %v374
        %v419 = vpop.f32.mrf.mxu0
        %v420 = vadd.f32 %v315, %v419
        %v421 = vpop.f32.mrf.mxu0
        %v422 = vpop.f32.mrf.mxu0
        %v423 = vadd.f32 %v320, %v422
        %v424 = vpop.f32.mrf.mxu0
        %425 = vmatprep.mubr.bf16.mxu0 0
        %426 = vmatmul.mubr.bf16.gmra.mxu0 %v377
        %v427 = vpop.f32.mrf.mxu0
        %v428 = vadd.f32 %v325, %v427
        %v429 = vpop.f32.mrf.mxu0
        %v430 = vpop.f32.mrf.mxu0
        %v431 = vadd.f32 %v330, %v430
        %v432 = vpop.f32.mrf.mxu0
        %433 = vmatprep.mubr.bf16.mxu0 0
        %434 = vmatmul.mubr.bf16.gmra.mxu0 %v380
        %v435 = vpop.f32.mrf.mxu0
        %v436 = vadd.f32 %v335, %v435
        %v437 = vpop.f32.mrf.mxu0
        %v438 = vpop.f32.mrf.mxu0
        %v439 = vadd.f32 %v340, %v438
        %v440 = vpop.f32.mrf.mxu0
        %441 = vmatprep.mubr.bf16.mxu0 0
        %442 = vmatmul.mubr.bf16.gmra.mxu0 %v383
        %v443 = vpop.f32.mrf.mxu0
        %v444 = vadd.f32 %v345, %v443
        %v445 = vpop.f32.mrf.mxu0
        %v446 = vpop.f32.mrf.mxu0
        %v447 = vadd.f32 %v350, %v446
        %v448 = vpop.f32.mrf.mxu0
        %449 = vdwg.mxu0
        %v450 = vpack.c.bf16 %v423, %v420
        %v451 = vpack.c.bf16 %v431, %v428
        %v452 = vpack.c.bf16 %v439, %v436
        %v453 = vpack.c.bf16 %v447, %v444
        %v454 = vtanh.bf16.pop %v450
        %v455 = vtanh.bf16.pop %v451
        %v456 = vtanh.bf16.pop %v452
        %v457 = vtanh.bf16.pop %v453
        %v458 = vld [vmem:[%s3] sm:$0x1]
        %vm459 = vcmask 523264
        %v461 = vsel %vm459, %v458, 0
        %463 = vmatprep.subr.bf16.mxu0 0
        %464 = vmatpush1.bf16.msra.mxu0 0
        %465 = vmatprep.subr.bf16.mxu0 0
        %466 = vmatpush1.bf16.msra.mxu0 0
        %467 = vmatprep.subr.bf16.mxu0 0
        %468 = vmatpush1.bf16.msra.mxu0 0
        %469 = vmatprep.subr.bf16.mxu0 0
        %470 = vmatpush1.bf16.msra.mxu0 0
        %471 = vmatprep.subr.bf16.mxu0 0
        %472 = vmatpush1.bf16.msra.mxu0 %v457
        %473 = vmatprep.subr.bf16.mxu0 0
        %474 = vmatpush1.bf16.msra.mxu0 %v456
        %475 = vmatprep.subr.bf16.mxu0 0
        %476 = vmatpush1.bf16.msra.mxu0 %v455
        %477 = vmatprep.subr.bf16.mxu0 0
        %478 = vmatpush1.bf16.msra.mxu0 %v454
        %479 = vmatprep.subr.bf16.mxu0 0
        %480 = vmatpush2.bf16.msra.mxu0 0
        %481 = vmatprep.subr.bf16.mxu0 0
        %482 = vmatpush2.bf16.msra.mxu0 0
        %483 = vmatprep.subr.bf16.mxu0 0
        %484 = vmatpush2.bf16.msra.mxu0 0
        %485 = vmatprep.subr.bf16.mxu0 0
        %486 = vmatpush2.bf16.msra.mxu0 0
        %487 = vmatprep.subr.bf16.mxu0 0
        %488 = vmatpush2.bf16.msra.mxu0 0
        %489 = vmatprep.subr.bf16.mxu0 0
        %490 = vmatpush2.bf16.msra.mxu0 0
        %491 = vmatprep.subr.bf16.mxu0 0
        %492 = vmatpush2.bf16.msra.mxu0 0
        %493 = vmatprep.subr.bf16.mxu0 0
        %494 = vmatpush2.bf16.msra.mxu0 0
        %495 = vmatprep.mubr.bf16.mxu0 0
        %496 = vmatmul.mubr.bf16.gmra.mxu0 %v461
        %v497 = vpop.f32.mrf.mxu0
        %v498 = vadd.f32 0.0, %v497
        %v499 = vpop.f32.mrf.mxu0
        %v500 = vpop.f32.mrf.mxu0
        %v501 = vpop.f32.mrf.mxu0
        %502 = vdwg.mxu0
        %503 = vst [vmem:[%s229] sm:$0x1] %v498
        %s504 = sand.u32 %s136, 1
        %s505 = scalar_lea.sflag [#allocation3], %s504
        %s506 = sand.u32 %s136, 1
        %s507 = scalar_lea.vmem [#allocation2], %s506
        // Predicated region
        $region37: #{bahdanau_attention_energy.1} parent=35 // pred_check
          %p508 = pneg %p146
        $region38: #{bahdanau_attention_energy.1} parent=35 // pred_check_branch
          %510 = sbr.rel (%p508) target = $region40
        $region39: #{bahdanau_attention_energy.1} parent=35 // pred_region
          %s512 = ssub.s32 16, 16
          %513 = vsyncadd %s505, %s512
          %s514 = sadd.s32 %s23, %s22
          %s515 = smul.addr %s514, 16
          %s516 = scalar_lea.hbm %s4, %s515
          %s518 = sshll.u32 %s507, 4
          %s519 = int_to_ptr.vmem [resolvable:$true] %s518
          %521 = dma.vmem_to_hbm [thread:$0]  %s519, 16, %s516, %s505
        $region40: #{bahdanau_attention_energy.1} parent=35 // pred_fallthru
          _
      $region36: #{bahdanau_attention_energy.1} parent=5 // pred_fallthru
        _
      %p522 = scmp.le.s32.totalorder 2, %s13
      // Predicated region
      $region41: #{bahdanau_attention_energy.1} parent=5 // pred_check
        %p523 = pneg %p522
      $region42: #{bahdanau_attention_energy.1} parent=5 // pred_check_branch
        %525 = sbr.rel (%p523) target = $region44
      $region43: #{bahdanau_attention_energy.1} parent=5 // pred_region
        %s526 = ssub.s32 %s13, 2
        // Predicated region
        $region45: #{bahdanau_attention_energy.1} parent=43 // pred_check
          %p527 = pneg %p152
        $region46: #{bahdanau_attention_energy.1} parent=43 // pred_check_branch
          %529 = sbr.rel (%p527) target = $region48
        $region47: #{bahdanau_attention_energy.1} parent=43 // pred_region
          %s530 = sand.u32 %s137, 1
          %s531 = scalar_lea.sflag [#allocation3], %s530
          %s532 = sand.u32 %s137, 1
          %s533 = scalar_lea.vmem [#allocation2], %s532
          %534 = dma.done %s531, 16
        $region48: #{bahdanau_attention_energy.1} parent=43 // pred_fallthru
          _
      $region44: #{bahdanau_attention_energy.1} parent=5 // pred_fallthru
        _
    $region6: #{bahdanau_attention_energy.1} parent=1 // loop_footer
      %s17 = sadd.s32 1, %s13
    $region7: #{bahdanau_attention_energy.1} parent=1 // loop_footer_branch
      %12 = sbr.rel target = $region3
    $region8: #{bahdanau_attention_energy.1} parent=1 // loop_exit
      _
    %535 = vsyncpa [#allocation3], 1
    %s536 = scalar_lea.sflag [#allocation3], 1
    %537 = vsyncpa %s536, 1

</llo_original>
